<compile_context>
chip_gen: v6e
topology: v6e:2x2x1
jax: 0.10.0
libtpu: 0.0.40
codegen_flags: <defaults>
</compile_context>

<pallas_src>
import functools
import math

import jax
import jax.numpy as jnp
from jax.experimental import pallas as pl
from jax.experimental.pallas import tpu as pltpu


def _rmsnorm_kernel(x_ref, w_ref, o_ref, *, eps):
    # x_ref: (tile_rows, hidden)  w_ref: (1, hidden)
    x = x_ref[...].astype(jnp.float32)
    ms = jnp.mean(x * x, axis=-1, keepdims=True)        # XLU lane reduce
    inv = jax.lax.rsqrt(ms + eps)                        # EUP
    w = w_ref[...].astype(jnp.float32)                   # broadcasts over rows
    o_ref[...] = (x * inv * w).astype(o_ref.dtype)


def _tpu_generation_info():
    """Returns (vmem_per_tc_bytes, num_tensorcores_per_chip). Defensive."""
    kind = ""
    try:
        kind = jax.devices()[0].device_kind.lower()
    except Exception:
        pass
    is_v7 = "7" in kind
    num_tc = 2 if is_v7 else 1            # v7x: 2 TCs/chip; v5e/v6e: 1 TC.
    # Fallback VMEM per TC: 128 MiB on v5e/v6e, 64 MiB on v7x/unknown.
    vmem = (64 if (is_v7 or not kind) else 128) * 1024 * 1024
    try:
        info = pltpu.get_tpu_info()
        cap = getattr(info, "vmem_capacity_bytes", None)
        if cap:
            vmem = int(cap)
    except Exception:
        pass
    # Guard: if the query reports a per-chip aggregate on v7x (2x64 MiB),
    # clamp to the physical per-TensorCore 64 MiB.
    if is_v7:
        vmem = min(vmem, 64 * 1024 * 1024)
    return vmem, num_tc


def _choose_tile_rows(rows, hidden, itemsize, vmem_budget, num_tc):
    # Pipeline-resident bytes per tile row:
    #   2x input buf + 2x output buf (double-buffered, input dtype)
    #   + ~2 full-tile f32 temporaries (x_f32 and the pre-cast product;
    #     x*x fuses into the lane reduce).
    bytes_per_row = hidden * (4 * itemsize + 2 * 4)
    tile_rows = 2048
    while tile_rows > 8 and tile_rows * bytes_per_row > vmem_budget:
        tile_rows //= 2
    # Only on multi-TC chips (v7x): keep enough / balanced grid steps so the
    # "parallel" axis shards evenly across both TensorCores. Single-TC chips
    # (v5e/v6e) gain nothing from extra steps -- keep tiles as large as fits.
    if num_tc > 1:
        while tile_rows > 64 and pl.cdiv(rows, tile_rows) < 2 * num_tc:
            tile_rows //= 2
    # Sublane packing: f32 -> 8 rows, bf16 -> 16, int8/fp8 -> 32.
    pack = max(8, 32 // max(1, int(itemsize)))
    # Never exceed the row count (rounded up to a packing multiple), and keep
    # tile_rows itself packing-aligned.
    tile_rows = min(tile_rows, max(pack, ((rows + pack - 1) // pack) * pack))
    tile_rows = max(pack, (tile_rows // pack) * pack)
    return tile_rows


def rmsnorm(x, weight, eps=1e-6, *, tile_rows=None):
    """RMSNorm over the last axis of x, scaled by `weight`.

    x: (..., hidden); weight: (hidden,). Returns same shape/dtype as x.
    """
    orig_shape = x.shape
    hidden = orig_shape[-1]
    rows = math.prod(orig_shape[:-1]) if len(orig_shape) > 1 else 1
    x2 = x.reshape(rows, hidden)
    w2 = weight.reshape(1, hidden)

    vmem_cap, num_tc = _tpu_generation_info()
    # Scoped-VMEM limit: leave a small headroom below physical capacity
    # (essential on v5e whose scoped default is only 16 MiB).
    vmem_limit = min(vmem_cap - (8 << 20), (7 * vmem_cap) // 8)
    # Pipeline-resident tile budget: ~3/4 of the limit (v7x: ~42 of 56 MiB).
    tile_budget = (3 * vmem_limit) // 4

    if tile_rows is None:
        tile_rows = _choose_tile_rows(
            rows, hidden, jnp.dtype(x.dtype).itemsize, tile_budget, num_tc)

    grid = (pl.cdiv(rows, tile_rows),)
    kernel = functools.partial(_rmsnorm_kernel, eps=float(eps))

    out = pl.pallas_call(
        kernel,
        out_shape=jax.ShapeDtypeStruct((rows, hidden), x.dtype),
        grid_spec=pltpu.PrefetchScalarGridSpec(
            num_scalar_prefetch=0,
            grid=grid,
            in_specs=[
                pl.BlockSpec((tile_rows, hidden), lambda i: (i, 0)),
                pl.BlockSpec((1, hidden), lambda i: (0, 0)),
            ],
            out_specs=pl.BlockSpec((tile_rows, hidden), lambda i: (i, 0)),
        ),
        compiler_params=pltpu.CompilerParams(
            dimension_semantics=("parallel",),
            vmem_limit_bytes=vmem_limit,
        ),
    )(x2, w2)

    return out.reshape(orig_shape)


def _reference(x, weight, eps):
    x32 = x.astype(jnp.float32)
    inv = jax.lax.rsqrt(jnp.mean(x32 * x32, axis=-1, keepdims=True) + eps)
    return (x32 * inv * weight.astype(jnp.float32)).astype(x.dtype)


if __name__ == "__main__":
    key = jax.random.PRNGKey(0)
    eps = 1e-6

    # Case 1: even row count (module-like small shape).
    batch, seq, hidden = 2, 8, 32
    x = jax.random.normal(key, (batch, seq, hidden), dtype=jnp.float32)
    weight = jnp.ones((hidden,), dtype=jnp.float32)  # module inits weight to ones
    y = jax.block_until_ready(rmsnorm(x, weight, eps))
    ref = _reference(x, weight, eps)
    assert y.shape == x.shape and y.dtype == x.dtype
    assert jnp.allclose(y, ref, atol=1e-5, rtol=1e-5)

    # Case 2: ragged row count (rows % tile_rows != 0) exercises the
    # partial-last-block masked writeback path.
    x2 = jax.random.normal(jax.random.PRNGKey(1), (3, 5, hidden), dtype=jnp.float32)
    y2 = jax.block_until_ready(rmsnorm(x2, weight, eps))
    ref2 = _reference(x2, weight, eps)
    assert y2.shape == x2.shape and y2.dtype == x2.dtype
    assert jnp.allclose(y2, ref2, atol=1e-5, rtol=1e-5)

    # Case 3: bf16 with a lane-dense hidden (multiple of 128) exercises the
    # sublane-packing-aware tile rounding.
    hidden3 = 256
    x3 = jax.random.normal(jax.random.PRNGKey(2), (2, 7, hidden3),
                           dtype=jnp.bfloat16)
    w3 = jnp.ones((hidden3,), dtype=jnp.bfloat16)
    y3 = jax.block_until_ready(rmsnorm(x3, w3, eps))
    ref3 = _reference(x3, w3, eps)
    assert y3.shape == x3.shape and y3.dtype == x3.dtype
    assert jnp.allclose(y3.astype(jnp.float32), ref3.astype(jnp.float32),
                        atol=2e-2, rtol=2e-2)

    print("KERNEL_OK")
</pallas_src>

<mosaic_0001>
module attributes {stable_mosaic.version = 11 : i64} {
  func.func @_rmsnorm_kernel(%arg0: i32, %arg1: memref<16x32xf32, #tpu.memory_space<vmem>>, %arg2: memref<1x32xf32, #tpu.memory_space<vmem>>, %arg3: memref<16x32xf32, #tpu.memory_space<vmem>>) attributes {dimension_semantics = [#tpu.dimension_semantics<parallel>], iteration_bounds = array<i64: 1>, scalar_prefetch = 0 : i64, scratch_operands = 0 : i64, tpu.core_type = #tpu.core_type<tc>, window_params = [{transform_indices = @transform_0, window_bounds = array<i64: 16, 32>}, {pipeline_mode = #tpu.pipeline_mode<synchronous>, transform_indices = @transform_1, window_bounds = array<i64: 1, 32>}, {transform_indices = @transform_2, window_bounds = array<i64: 16, 32>}]} {
    %c0 = arith.constant 0 : index
    %c0_0 = arith.constant 0 : index
    %0 = vector.load %arg1[%c0, %c0_0] : memref<16x32xf32, #tpu.memory_space<vmem>>, vector<16x32xf32>
    %1 = arith.mulf %0, %0 : vector<16x32xf32>
    %cst = arith.constant dense<0.000000e+00> : vector<16xf32>
    %2 = vector.multi_reduction <add>, %1, %cst [1] : vector<16x32xf32> to vector<16xf32>
    %3 = vector.shape_cast %2 : vector<16xf32> to vector<16x1xf32>
    %cst_1 = arith.constant 3.200000e+01 : f32
    %4 = vector.broadcast %cst_1 : f32 to vector<16x1xf32>
    %5 = arith.divf %3, %4 : vector<16x1xf32>
    %cst_2 = arith.constant 9.99999997E-7 : f32
    %6 = vector.broadcast %cst_2 : f32 to vector<16x1xf32>
    %7 = arith.addf %5, %6 : vector<16x1xf32>
    %8 = math.rsqrt %7 : vector<16x1xf32>
    %c0_3 = arith.constant 0 : index
    %c0_4 = arith.constant 0 : index
    %9 = vector.load %arg2[%c0_3, %c0_4] : memref<1x32xf32, #tpu.memory_space<vmem>>, vector<1x32xf32>
    %10 = vector.broadcast %8 : vector<16x1xf32> to vector<16x32xf32>
    %11 = arith.mulf %0, %10 : vector<16x32xf32>
    %12 = vector.broadcast %9 : vector<1x32xf32> to vector<16x32xf32>
    %13 = arith.mulf %11, %12 : vector<16x32xf32>
    %c0_5 = arith.constant 0 : index
    %c0_6 = arith.constant 0 : index
    %14 = vector.load %arg3[%c0_5, %c0_6] : memref<16x32xf32, #tpu.memory_space<vmem>>, vector<16x32xf32>
    tpu.vector_store %arg3[%c0_5, %c0_6], %13 {strides = array<i32>} : memref<16x32xf32, #tpu.memory_space<vmem>>, vector<16x32xf32>,
    return
  }
  func.func @transform_0(%arg0: i32) -> (i32, i32) {
    %c0_i32 = arith.constant 0 : i32
    %c0_i32_0 = arith.constant 0 : i32
    return %arg0, %c0_i32 : i32, i32
  }
  func.func @transform_1(%arg0: i32) -> (i32, i32) {
    %c0_i32 = arith.constant 0 : i32
    %c0_i32_0 = arith.constant 0 : i32
    %c0_i32_1 = arith.constant 0 : i32
    return %c0_i32, %c0_i32_0 : i32, i32
  }
  func.func @transform_2(%arg0: i32) -> (i32, i32) {
    %c0_i32 = arith.constant 0 : i32
    %c0_i32_0 = arith.constant 0 : i32
    return %arg0, %c0_i32 : i32, i32
  }
}

</mosaic_0001>

<llo_original>
// kernel: tpu_custom_call.1
$region0: #{tpu_custom_call.1}
  #allocation0 [shape = 'u32[]', space=smem, size = 0x4, offset = 0x4, fixed_abs, tag = 'smem constant byte address 0x4 - core index']
  #allocation1 [shape = 'u32[144,128]{1,0:T(1,128)}', space=vmem, size = 0x12000, scoped, tag = 'internal scratch']
  %s0 = inlined_call_operand.hbm [shape: f32[16,32], index: 0, kind: input, shape index: {}]
  %s1 = inlined_call_operand.vmem [shape: f32[1,32], index: 1, kind: input, shape index: {}]
  %s2 = inlined_call_operand.hbm [shape: f32[16,32], index: 2, kind: output, shape index: {}]
  %s3 = sld [smem:[#allocation0]]
  $region22: #{tpu_custom_call.1} parent=0
    _
  %s5 = ssub.s32 1, %s3
  %s6 = scalar_select 0, %s5, %s3
  $region1: #{tpu_custom_call.1} parent=0
    #allocation2 [shape = 'u8[8192]{0}', space=vmem, size = 0x2000, scoped, tag = 'input window, operand 0, single buffered']
    #allocation3 [shape = 's32[1]{0}', space=sflag, size = 0x4, scoped, tag = 'scoped memory for tpu_custom_call.1']
    #allocation4 [shape = 's32[1]{0}', space=sflag, size = 0x4, scoped, tag = 'scoped memory for tpu_custom_call.1']
    #allocation5 [shape = 'u8[8192]{0}', space=vmem, size = 0x2000, scoped, tag = 'output window, operand 0, single buffered']
    %7 = vsyncpa [#allocation3], 0
    %8 = vsyncpa [#allocation4], 0
    // Predicated region
    $region2: #{tpu_custom_call.1} parent=1 // pred_check
      _
    $region3: #{tpu_custom_call.1} parent=1 // pred_check_branch
      %10 = sbr.rel (0) target = $region5
    $region4: #{tpu_custom_call.1} parent=1 // pred_region
      %s12 = ssub.s32 256, 256
      %13 = vsyncadd [#allocation3], %s12
      %s14 = sshll.u32 [#allocation2], 4
      %s15 = int_to_ptr.vmem [resolvable:$true] %s14
      %20 = dma.hbm_to_vmem [thread:$0]  %s0, 256, %s15, [#allocation3], 128, 128, 8
    $region5: #{tpu_custom_call.1} parent=1 // pred_fallthru
      _
    // Predicated region
    $region6: #{tpu_custom_call.1} parent=1 // pred_check
      _
    $region7: #{tpu_custom_call.1} parent=1 // pred_check_branch
      %22 = sbr.rel (0) target = $region9
    $region8: #{tpu_custom_call.1} parent=1 // pred_region
      _
    $region9: #{tpu_custom_call.1} parent=1 // pred_fallthru
      _
    // Predicated region
    $region10: #{tpu_custom_call.1} parent=1 // pred_check
      _
    $region11: #{tpu_custom_call.1} parent=1 // pred_check_branch
      %24 = sbr.rel (0) target = $region13
    $region12: #{tpu_custom_call.1} parent=1 // pred_region
      %25 = dma.done [#allocation3], 256
    $region13: #{tpu_custom_call.1} parent=1 // pred_fallthru
      _
    %v26 = vld [vmem:[#allocation2] sm:$0xff]
    %v27 = vld [vmem:[#allocation2 + $0x8] sm:$0xff]
    %v28 = vmul.f32 %v26, %v26
    %v29 = vmul.f32 %v27, %v27
    %vm30 = vcmask 261120
    %v31 = vsel %vm30, %v28, 0.0
    %32 = vadd.xlane.f32.xlu0 %v31
    %v33 = vpop.xlane.xlu0 %32
    %v34 = vsel %vm30, %v29, 0.0
    %35 = vadd.xlane.f32.xlu0 %v34
    %v36 = vpop.xlane.xlu0 %35
    %v37 = vrcp.pop 32.0
    %v38 = vmul.f32 %v33, %v37
    %v39 = vmul.f32 %v36, %v37
    %v40 = vadd.f32 %v38, 1e-06
    %v41 = vadd.f32 %v39, 1e-06
    %v42 = vrsqrt.pop %v40
    %v43 = vrsqrt.pop %v41
    %v44 = vld [vmem:[%s1] sm:$0x1]
    %v45 = vmul.f32 %v26, %v42
    %v46 = vmul.f32 %v27, %v43
    %v48 = vlaneseq
    %v49 = vshrl.u32 %v48, 7
    %v50 = vsub.s32 0, %v49
    %v51 = vrot.slane %v44, %v50
    %v53 = vmul.f32 %v45, %v51
    %v54 = vmul.f32 %v46, %v51
    %55 = vst.msk [vmem:[#allocation5] sm:$0xff] %vm30, %v53
    %56 = vst.msk [vmem:[#allocation5 + $0x8] sm:$0xff] %vm30, %v54
    // Predicated region
    $region14: #{tpu_custom_call.1} parent=1 // pred_check
      _
    $region15: #{tpu_custom_call.1} parent=1 // pred_check_branch
      %58 = sbr.rel (0) target = $region17
    $region16: #{tpu_custom_call.1} parent=1 // pred_region
      %s60 = ssub.s32 256, 256
      %61 = vsyncadd [#allocation4], %s60
      %s62 = sshll.u32 [#allocation5], 4
      %s63 = int_to_ptr.vmem [resolvable:$true] %s62
      %68 = dma.vmem_to_hbm [thread:$0]  %s63, 256, %s2, [#allocation4], 128, 128, 8
    $region17: #{tpu_custom_call.1} parent=1 // pred_fallthru
      _
    // Predicated region
    $region18: #{tpu_custom_call.1} parent=1 // pred_check
      _
    $region19: #{tpu_custom_call.1} parent=1 // pred_check_branch
      %70 = sbr.rel (0) target = $region21
    $region20: #{tpu_custom_call.1} parent=1 // pred_region
      %71 = dma.done [#allocation4], 256
    $region21: #{tpu_custom_call.1} parent=1 // pred_fallthru
      _
    %72 = vsyncpa [#allocation3], 1
    %73 = vsyncpa [#allocation4], 1

</llo_original>
